<compile_context>
chip_gen: v7x
topology: tpu7x:2x2x1
jax: 0.10.0
libtpu: 0.0.40
codegen_flags: <defaults>
</compile_context>

<pallas_src>
import jax
import jax.numpy as jnp
import numpy as np
from jax.experimental import pallas as pl
from jax.experimental.pallas import tpu as pltpu

EPS = 1e-5
KSIZE = 3  # depthwise kernel size (module default)


def hyper_patch_inverted_residual(x, w_sig, bn1, bn2, *, Fh, Fw):
    """x: (B, C, H, W) NCHW. w_sig: (B, C*K*K + C*C, Fh, Fw) hyper weight signal."""
    B, C, H, W = x.shape
    PH, PW = H // Fh, W // Fw
    P1 = C * KSIZE * KSIZE
    WC = W * C
    WPC = (W + 2) * C  # padded-row lane width

    gamma1, beta1, mean1, var1 = bn1
    gamma2, beta2, mean2, var2 = bn2
    s1 = gamma1 / jnp.sqrt(var1 + EPS)
    b1 = beta1 - mean1 * s1
    s2 = gamma2 / jnp.sqrt(var2 + EPS)
    b2 = beta2 - mean2 * s2

    # ---------------- host-side layout / weight prep (plain JAX) -------------
    # activations: NCHW -> lane-dense channels-last (B, H, W*C)
    x_l = jnp.transpose(x, (0, 2, 3, 1)).reshape(B, H, WC)

    # depthwise hyper weights -> per-pixel tap maps (B, 9, H, W*C), BN1 folded.
    # PyTorch flatten order of the grouped conv weight is (c_out, 1, kh, kw).
    w1r = w_sig[:, :P1].reshape(B, C, KSIZE, KSIZE, Fh, Fw)
    w1r = w1r * s1[None, :, None, None, None, None]
    w1k = jnp.transpose(w1r, (0, 2, 3, 4, 5, 1)).reshape(B, KSIZE * KSIZE, Fh, Fw, C)
    w1map = jnp.broadcast_to(
        w1k[:, :, :, None, :, None, :],
        (B, KSIZE * KSIZE, Fh, PH, Fw, PW, C)).reshape(B, KSIZE * KSIZE, H, WC)
    w1map = w1map.astype(jnp.float32)

    # pointwise hyper weights -> per-patch-row block-diagonal (W*C, W*C),
    # BN2 scale folded.  Row index = w*C + c_in, col index = w*C + c_out.
    w2r = w_sig[:, P1:].reshape(B, C, C, Fh, Fw)          # [b, co, ci, fh, fw]
    w2r = w2r * s2[None, :, None, None, None]
    w2t = jnp.transpose(w2r, (0, 3, 4, 2, 1))             # (B, Fh, Fw, ci, co)
    w2pix = jnp.repeat(w2t, PW, axis=2)                   # (B, Fh, W, ci, co)
    eye = jnp.eye(W, dtype=w2pix.dtype)
    w2blk = jnp.einsum('xy,bfxio->bfxiyo', eye, w2pix).reshape(B, Fh, WC, WC)
    w2blk = w2blk.astype(jnp.float32)

    # BN shifts as per-lane bias rows: [BN1 shift, BN2 shift], tiled per pixel.
    bias = jnp.stack([jnp.tile(b1, W), jnp.tile(b2, W)]).astype(jnp.float32)  # (2, WC)

    # ---------------- Pallas kernel (one grid step == one batch image) -------
    def kernel(x_ref, w1_ref, w2_ref, bias_ref, o_ref, xpad_ref):
        # x_ref   : (H, W*C)            lane-dense channels-last image
        # w1_ref  : (9, H, W*C)         per-pixel depthwise tap weights (BN1 folded)
        # w2_ref  : (Fh, W*C, W*C)      per-patch-row block-diagonal 1x1 weights
        # bias_ref: (2, W*C)            [BN1 shift, BN2 shift] per lane
        # o_ref   : (H, W*C)            output
        # xpad_ref: (H+2, (W+2)*C)      VMEM scratch: reflect-padded image
        x_f = x_ref[...].astype(jnp.float32)

        # Build the reflect-padded image in VMEM (no extra HBM round trip).
        xpad_ref[1:H + 1, C:(W + 1) * C] = x_f
        xpad_ref[1:H + 1, 0:C] = x_f[:, C:2 * C]                       # left  <- col 1
        xpad_ref[1:H + 1, (W + 1) * C:WPC] = x_f[:, (W - 2) * C:(W - 1) * C]  # right <- col W-2
        xpad_ref[0:1, :] = xpad_ref[2:3, :]                            # top   <- row 1
        xpad_ref[H + 1:H + 2, :] = xpad_ref[H - 1:H, :]                # bot   <- row H-2

        # Depthwise 3x3 conv: 9 VPU FMAs against pre-broadcast per-pixel taps.
        y = jnp.zeros((H, WC), dtype=jnp.float32)
        for di in range(KSIZE):
            for dj in range(KSIZE):
                win = xpad_ref[di:di + H, dj * C:dj * C + WC]
                y = y + win * w1_ref[di * KSIZE + dj]

        # BN1 shift + ReLU6.
        y = jnp.clip(y + bias_ref[0], 0.0, 6.0)

        # Pointwise 1x1 conv: block-diagonal (128x128) matmul per patch-row on
        # the MXU, then BN2 shift + residual; lane-dense unmasked stores.
        b2_row = bias_ref[1]
        for fh in range(Fh):
            r0 = fh * PH
            z = jnp.dot(y[r0:r0 + PH, :], w2_ref[fh],
                        preferred_element_type=jnp.float32)
            o_ref[r0:r0 + PH, :] = (z + b2_row + x_f[r0:r0 + PH, :]).astype(o_ref.dtype)

    flops = B * (2 * KSIZE * KSIZE * H * WC + 2 * Fh * PH * WC * WC)
    bytes_accessed = 4 * (B * H * WC            # x in
                          + B * KSIZE * KSIZE * H * WC   # w1 maps
                          + B * Fh * WC * WC    # w2 block-diag
                          + 2 * WC              # bias
                          + B * H * WC)         # out

    out_l = pl.pallas_call(
        kernel,
        out_shape=jax.ShapeDtypeStruct((B, H, WC), x.dtype),
        grid_spec=pltpu.PrefetchScalarGridSpec(
            num_scalar_prefetch=0,
            grid=(B,),
            in_specs=[
                pl.BlockSpec((None, H, WC), lambda b: (b, 0, 0)),
                pl.BlockSpec((None, KSIZE * KSIZE, H, WC), lambda b: (b, 0, 0, 0)),
                pl.BlockSpec((None, Fh, WC, WC), lambda b: (b, 0, 0, 0)),
                pl.BlockSpec((2, WC), lambda b: (0, 0)),
            ],
            out_specs=pl.BlockSpec((None, H, WC), lambda b: (b, 0, 0)),
            scratch_shapes=[pltpu.VMEM((H + 2, WPC), jnp.float32)],
        ),
        compiler_params=pltpu.CompilerParams(
            dimension_semantics=("parallel",)),
        cost_estimate=pl.CostEstimate(
            flops=flops, transcendentals=0, bytes_accessed=bytes_accessed),
    )(x_l, w1map, w2blk, bias)

    out = out_l.reshape(B, H, W, C)
    return jnp.transpose(out, (0, 3, 1, 2))                            # back to NCHW


def reference_forward(x, w_sig, bn1, bn2, *, Fh, Fw):
    """Pure-JAX reference (per-pixel weight broadcast over the full image)."""
    B, C, H, W = x.shape
    PH, PW = H // Fh, W // Fw
    P1 = C * KSIZE * KSIZE
    gamma1, beta1, mean1, var1 = bn1
    gamma2, beta2, mean2, var2 = bn2
    s1 = gamma1 / jnp.sqrt(var1 + EPS)
    b1 = beta1 - mean1 * s1
    s2 = gamma2 / jnp.sqrt(var2 + EPS)
    b2 = beta2 - mean2 * s2

    w1 = jnp.transpose(w_sig[:, :P1], (0, 2, 3, 1)).reshape(B, Fh, Fw, C, KSIZE, KSIZE)
    w2 = jnp.transpose(w_sig[:, P1:], (0, 2, 3, 1)).reshape(B, Fh, Fw, C, C)
    w1_full = jnp.repeat(jnp.repeat(w1, PH, axis=1), PW, axis=2)  # (B,H,W,C,3,3)
    w2_full = jnp.repeat(jnp.repeat(w2, PH, axis=1), PW, axis=2)  # (B,H,W,Co,Ci)

    xp = jnp.pad(x, ((0, 0), (0, 0), (1, 1), (1, 1)), mode="reflect")
    y = jnp.zeros((B, C, H, W), jnp.float32)
    for di in range(KSIZE):
        for dj in range(KSIZE):
            tap_w = jnp.transpose(w1_full[..., di, dj], (0, 3, 1, 2))
            y = y + xp[:, :, di:di + H, dj:dj + W] * tap_w
    y = jnp.clip(y * s1[None, :, None, None] + b1[None, :, None, None], 0.0, 6.0)
    z = jnp.einsum("bhwoc,bchw->bohw", w2_full, y)
    z = z * s2[None, :, None, None] + b2[None, :, None, None]
    return x + z


if __name__ == "__main__":
    B, C, H, W = 2, 8, 16, 16           # in_nc == out_nc == hidden_dim (expand_ratio=1)
    Fh, Fw = 2, 2                        # patch grid of the hyper weight signal
    P1 = C * KSIZE * KSIZE               # depthwise hyper params per patch
    P2 = C * C                           # pointwise hyper params per patch

    key = jax.random.PRNGKey(0)
    ks = jax.random.split(key, 10)
    x = jax.random.normal(ks[0], (B, C, H, W), jnp.float32)
    w_sig = 0.2 * jax.random.normal(ks[1], (B, P1 + P2, Fh, Fw), jnp.float32)

    bn1 = (1.0 + 0.1 * jax.random.normal(ks[2], (C,), jnp.float32),
           0.1 * jax.random.normal(ks[3], (C,), jnp.float32),
           0.1 * jax.random.normal(ks[4], (C,), jnp.float32),
           jax.random.uniform(ks[5], (C,), jnp.float32, minval=0.5, maxval=1.5))
    bn2 = (1.0 + 0.1 * jax.random.normal(ks[6], (C,), jnp.float32),
           0.1 * jax.random.normal(ks[7], (C,), jnp.float32),
           0.1 * jax.random.normal(ks[8], (C,), jnp.float32),
           jax.random.uniform(ks[9], (C,), jnp.float32, minval=0.5, maxval=1.5))

    out = hyper_patch_inverted_residual(x, w_sig, bn1, bn2, Fh=Fh, Fw=Fw)
    out = jax.block_until_ready(out)

    ref = reference_forward(x, w_sig, bn1, bn2, Fh=Fh, Fw=Fw)
    np.testing.assert_allclose(np.asarray(out), np.asarray(ref), rtol=1e-4, atol=2e-4)
    print("KERNEL_OK")
</pallas_src>

<mosaic_0001>
module attributes {stable_mosaic.version = 11 : i64} {
  func.func @kernel(%arg0: i32, %arg1: memref<1x16x128xf32, #tpu.memory_space<vmem>>, %arg2: memref<1x9x16x128xf32, #tpu.memory_space<vmem>>, %arg3: memref<1x2x128x128xf32, #tpu.memory_space<vmem>>, %arg4: memref<2x128xf32, #tpu.memory_space<vmem>>, %arg5: memref<1x16x128xf32, #tpu.memory_space<vmem>>, %arg6: memref<18x144xf32, #tpu.memory_space<vmem>>) attributes {dimension_semantics = [#tpu.dimension_semantics<parallel>], iteration_bounds = array<i64: 2>, scalar_prefetch = 0 : i64, scratch_operands = 1 : i64, tpu.core_type = #tpu.core_type<tc>, window_params = [{transform_indices = @transform_0, window_bounds = array<i64: 1, 16, 128>}, {transform_indices = @transform_1, window_bounds = array<i64: 1, 9, 16, 128>}, {transform_indices = @transform_2, window_bounds = array<i64: 1, 2, 128, 128>}, {pipeline_mode = #tpu.pipeline_mode<synchronous>, transform_indices = @transform_3, window_bounds = array<i64: 2, 128>}, {transform_indices = @transform_4, window_bounds = array<i64: 1, 16, 128>}]} {
    %c0 = arith.constant 0 : index
    %c0_0 = arith.constant 0 : index
    %c0_1 = arith.constant 0 : index
    %0 = vector.load %arg1[%c0, %c0_0, %c0_1] : memref<1x16x128xf32, #tpu.memory_space<vmem>>, vector<1x16x128xf32>
    %1 = vector.shape_cast %0 : vector<1x16x128xf32> to vector<16x128xf32>
    %c1 = arith.constant 1 : index
    %c8 = arith.constant 8 : index
    %2 = vector.load %arg6[%c1, %c8] : memref<18x144xf32, #tpu.memory_space<vmem>>, vector<16x128xf32>
    tpu.vector_store %arg6[%c1, %c8], %1 {strides = array<i32>} : memref<18x144xf32, #tpu.memory_space<vmem>>, vector<16x128xf32>,
    %3 = vector.extract_strided_slice %1 {offsets = [0, 8], sizes = [16, 8], strides = [1, 1]} : vector<16x128xf32> to vector<16x8xf32>
    %c1_2 = arith.constant 1 : index
    %c0_3 = arith.constant 0 : index
    %4 = vector.load %arg6[%c1_2, %c0_3] : memref<18x144xf32, #tpu.memory_space<vmem>>, vector<16x8xf32>
    tpu.vector_store %arg6[%c1_2, %c0_3], %3 {strides = array<i32>} : memref<18x144xf32, #tpu.memory_space<vmem>>, vector<16x8xf32>,
    %5 = vector.extract_strided_slice %1 {offsets = [0, 112], sizes = [16, 8], strides = [1, 1]} : vector<16x128xf32> to vector<16x8xf32>
    %c1_4 = arith.constant 1 : index
    %c136 = arith.constant 136 : index
    %6 = vector.load %arg6[%c1_4, %c136] : memref<18x144xf32, #tpu.memory_space<vmem>>, vector<16x8xf32>
    tpu.vector_store %arg6[%c1_4, %c136], %5 {strides = array<i32>} : memref<18x144xf32, #tpu.memory_space<vmem>>, vector<16x8xf32>,
    %c2 = arith.constant 2 : index
    %c0_5 = arith.constant 0 : index
    %7 = vector.load %arg6[%c2, %c0_5] : memref<18x144xf32, #tpu.memory_space<vmem>>, vector<1x144xf32>
    %c0_6 = arith.constant 0 : index
    %c0_7 = arith.constant 0 : index
    %8 = vector.load %arg6[%c0_6, %c0_7] : memref<18x144xf32, #tpu.memory_space<vmem>>, vector<1x144xf32>
    tpu.vector_store %arg6[%c0_6, %c0_7], %7 {strides = array<i32>} : memref<18x144xf32, #tpu.memory_space<vmem>>, vector<1x144xf32>,
    %c15 = arith.constant 15 : index
    %c0_8 = arith.constant 0 : index
    %9 = vector.load %arg6[%c15, %c0_8] : memref<18x144xf32, #tpu.memory_space<vmem>>, vector<1x144xf32>
    %c17 = arith.constant 17 : index
    %c0_9 = arith.constant 0 : index
    %10 = vector.load %arg6[%c17, %c0_9] : memref<18x144xf32, #tpu.memory_space<vmem>>, vector<1x144xf32>
    tpu.vector_store %arg6[%c17, %c0_9], %9 {strides = array<i32>} : memref<18x144xf32, #tpu.memory_space<vmem>>, vector<1x144xf32>,
    %cst = arith.constant 0.000000e+00 : f32
    %11 = vector.broadcast %cst : f32 to vector<16x128xf32>
    %c0_10 = arith.constant 0 : index
    %c0_11 = arith.constant 0 : index
    %12 = vector.load %arg6[%c0_10, %c0_11] : memref<18x144xf32, #tpu.memory_space<vmem>>, vector<16x128xf32>
    %c0_12 = arith.constant 0 : index
    %c0_13 = arith.constant 0 : index
    %c0_14 = arith.constant 0 : index
    %c0_15 = arith.constant 0 : index
    %13 = vector.load %arg2[%c0_12, %c0_13, %c0_14, %c0_15] : memref<1x9x16x128xf32, #tpu.memory_space<vmem>>, vector<1x1x16x128xf32>
    %14 = vector.shape_cast %13 : vector<1x1x16x128xf32> to vector<16x128xf32>
    %15 = arith.mulf %12, %14 : vector<16x128xf32>
    %16 = arith.addf %11, %15 : vector<16x128xf32>
    %c0_16 = arith.constant 0 : index
    %c8_17 = arith.constant 8 : index
    %17 = vector.load %arg6[%c0_16, %c8_17] : memref<18x144xf32, #tpu.memory_space<vmem>>, vector<16x128xf32>
    %c0_18 = arith.constant 0 : index
    %c1_19 = arith.constant 1 : index
    %c0_20 = arith.constant 0 : index
    %c0_21 = arith.constant 0 : index
    %18 = vector.load %arg2[%c0_18, %c1_19, %c0_20, %c0_21] : memref<1x9x16x128xf32, #tpu.memory_space<vmem>>, vector<1x1x16x128xf32>
    %19 = vector.shape_cast %18 : vector<1x1x16x128xf32> to vector<16x128xf32>
    %20 = arith.mulf %17, %19 : vector<16x128xf32>
    %21 = arith.addf %16, %20 : vector<16x128xf32>
    %c0_22 = arith.constant 0 : index
    %c16 = arith.constant 16 : index
    %22 = vector.load %arg6[%c0_22, %c16] : memref<18x144xf32, #tpu.memory_space<vmem>>, vector<16x128xf32>
    %c0_23 = arith.constant 0 : index
    %c2_24 = arith.constant 2 : index
    %c0_25 = arith.constant 0 : index
    %c0_26 = arith.constant 0 : index
    %23 = vector.load %arg2[%c0_23, %c2_24, %c0_25, %c0_26] : memref<1x9x16x128xf32, #tpu.memory_space<vmem>>, vector<1x1x16x128xf32>
    %24 = vector.shape_cast %23 : vector<1x1x16x128xf32> to vector<16x128xf32>
    %25 = arith.mulf %22, %24 : vector<16x128xf32>
    %26 = arith.addf %21, %25 : vector<16x128xf32>
    %c1_27 = arith.constant 1 : index
    %c0_28 = arith.constant 0 : index
    %27 = vector.load %arg6[%c1_27, %c0_28] : memref<18x144xf32, #tpu.memory_space<vmem>>, vector<16x128xf32>
    %c0_29 = arith.constant 0 : index
    %c3 = arith.constant 3 : index
    %c0_30 = arith.constant 0 : index
    %c0_31 = arith.constant 0 : index
    %28 = vector.load %arg2[%c0_29, %c3, %c0_30, %c0_31] : memref<1x9x16x128xf32, #tpu.memory_space<vmem>>, vector<1x1x16x128xf32>
    %29 = vector.shape_cast %28 : vector<1x1x16x128xf32> to vector<16x128xf32>
    %30 = arith.mulf %27, %29 : vector<16x128xf32>
    %31 = arith.addf %26, %30 : vector<16x128xf32>
    %c1_32 = arith.constant 1 : index
    %c8_33 = arith.constant 8 : index
    %32 = vector.load %arg6[%c1_32, %c8_33] : memref<18x144xf32, #tpu.memory_space<vmem>>, vector<16x128xf32>
    %c0_34 = arith.constant 0 : index
    %c4 = arith.constant 4 : index
    %c0_35 = arith.constant 0 : index
    %c0_36 = arith.constant 0 : index
    %33 = vector.load %arg2[%c0_34, %c4, %c0_35, %c0_36] : memref<1x9x16x128xf32, #tpu.memory_space<vmem>>, vector<1x1x16x128xf32>
    %34 = vector.shape_cast %33 : vector<1x1x16x128xf32> to vector<16x128xf32>
    %35 = arith.mulf %32, %34 : vector<16x128xf32>
    %36 = arith.addf %31, %35 : vector<16x128xf32>
    %c1_37 = arith.constant 1 : index
    %c16_38 = arith.constant 16 : index
    %37 = vector.load %arg6[%c1_37, %c16_38] : memref<18x144xf32, #tpu.memory_space<vmem>>, vector<16x128xf32>
    %c0_39 = arith.constant 0 : index
    %c5 = arith.constant 5 : index
    %c0_40 = arith.constant 0 : index
    %c0_41 = arith.constant 0 : index
    %38 = vector.load %arg2[%c0_39, %c5, %c0_40, %c0_41] : memref<1x9x16x128xf32, #tpu.memory_space<vmem>>, vector<1x1x16x128xf32>
    %39 = vector.shape_cast %38 : vector<1x1x16x128xf32> to vector<16x128xf32>
    %40 = arith.mulf %37, %39 : vector<16x128xf32>
    %41 = arith.addf %36, %40 : vector<16x128xf32>
    %c2_42 = arith.constant 2 : index
    %c0_43 = arith.constant 0 : index
    %42 = vector.load %arg6[%c2_42, %c0_43] : memref<18x144xf32, #tpu.memory_space<vmem>>, vector<16x128xf32>
    %c0_44 = arith.constant 0 : index
    %c6 = arith.constant 6 : index
    %c0_45 = arith.constant 0 : index
    %c0_46 = arith.constant 0 : index
    %43 = vector.load %arg2[%c0_44, %c6, %c0_45, %c0_46] : memref<1x9x16x128xf32, #tpu.memory_space<vmem>>, vector<1x1x16x128xf32>
    %44 = vector.shape_cast %43 : vector<1x1x16x128xf32> to vector<16x128xf32>
    %45 = arith.mulf %42, %44 : vector<16x128xf32>
    %46 = arith.addf %41, %45 : vector<16x128xf32>
    %c2_47 = arith.constant 2 : index
    %c8_48 = arith.constant 8 : index
    %47 = vector.load %arg6[%c2_47, %c8_48] : memref<18x144xf32, #tpu.memory_space<vmem>>, vector<16x128xf32>
    %c0_49 = arith.constant 0 : index
    %c7 = arith.constant 7 : index
    %c0_50 = arith.constant 0 : index
    %c0_51 = arith.constant 0 : index
    %48 = vector.load %arg2[%c0_49, %c7, %c0_50, %c0_51] : memref<1x9x16x128xf32, #tpu.memory_space<vmem>>, vector<1x1x16x128xf32>
    %49 = vector.shape_cast %48 : vector<1x1x16x128xf32> to vector<16x128xf32>
    %50 = arith.mulf %47, %49 : vector<16x128xf32>
    %51 = arith.addf %46, %50 : vector<16x128xf32>
    %c2_52 = arith.constant 2 : index
    %c16_53 = arith.constant 16 : index
    %52 = vector.load %arg6[%c2_52, %c16_53] : memref<18x144xf32, #tpu.memory_space<vmem>>, vector<16x128xf32>
    %c0_54 = arith.constant 0 : index
    %c8_55 = arith.constant 8 : index
    %c0_56 = arith.constant 0 : index
    %c0_57 = arith.constant 0 : index
    %53 = vector.load %arg2[%c0_54, %c8_55, %c0_56, %c0_57] : memref<1x9x16x128xf32, #tpu.memory_space<vmem>>, vector<1x1x16x128xf32>
    %54 = vector.shape_cast %53 : vector<1x1x16x128xf32> to vector<16x128xf32>
    %55 = arith.mulf %52, %54 : vector<16x128xf32>
    %56 = arith.addf %51, %55 : vector<16x128xf32>
    %c0_58 = arith.constant 0 : index
    %c0_59 = arith.constant 0 : index
    %57 = vector.load %arg4[%c0_58, %c0_59] : memref<2x128xf32, #tpu.memory_space<vmem>>, vector<1x128xf32>
    %58 = vector.shape_cast %57 : vector<1x128xf32> to vector<128xf32>
    %59 = vector.shape_cast %58 : vector<128xf32> to vector<1x128xf32>
    %60 = vector.broadcast %59 : vector<1x128xf32> to vector<16x128xf32>
    %61 = arith.addf %56, %60 : vector<16x128xf32>
    %cst_60 = arith.constant 0.000000e+00 : f32
    %cst_61 = arith.constant 6.000000e+00 : f32
    %62 = vector.broadcast %cst_60 : f32 to vector<16x128xf32>
    %63 = arith.maximumf %62, %61 : vector<16x128xf32>
    %64 = vector.broadcast %cst_61 : f32 to vector<16x128xf32>
    %65 = arith.minimumf %64, %63 : vector<16x128xf32>
    %c1_62 = arith.constant 1 : index
    %c0_63 = arith.constant 0 : index
    %66 = vector.load %arg4[%c1_62, %c0_63] : memref<2x128xf32, #tpu.memory_space<vmem>>, vector<1x128xf32>
    %67 = vector.shape_cast %66 : vector<1x128xf32> to vector<128xf32>
    %68 = vector.extract_strided_slice %65 {offsets = [0, 0], sizes = [8, 128], strides = [1, 1]} : vector<16x128xf32> to vector<8x128xf32>
    %c0_64 = arith.constant 0 : index
    %c0_65 = arith.constant 0 : index
    %c0_66 = arith.constant 0 : index
    %c0_67 = arith.constant 0 : index
    %69 = vector.load %arg3[%c0_64, %c0_65, %c0_66, %c0_67] : memref<1x2x128x128xf32, #tpu.memory_space<vmem>>, vector<1x1x128x128xf32>
    %70 = vector.shape_cast %69 : vector<1x1x128x128xf32> to vector<128x128xf32>
    %cst_68 = arith.constant dense<0.000000e+00> : vector<8x128xf32>
    %71 = tpu.matmul %68, %70, %cst_68 {dimension_numbers = #tpu.dot_dimension_numbers<[1], [0], [0], [1], [0, 0, 1, 1], [], []>} : vector<8x128xf32>, vector<128x128xf32>, vector<8x128xf32> -> vector<8x128xf32>
    %72 = vector.shape_cast %67 : vector<128xf32> to vector<1x128xf32>
    %73 = vector.broadcast %72 : vector<1x128xf32> to vector<8x128xf32>
    %74 = arith.addf %71, %73 : vector<8x128xf32>
    %75 = vector.extract_strided_slice %1 {offsets = [0, 0], sizes = [8, 128], strides = [1, 1]} : vector<16x128xf32> to vector<8x128xf32>
    %76 = arith.addf %74, %75 : vector<8x128xf32>
    %c0_69 = arith.constant 0 : index
    %c0_70 = arith.constant 0 : index
    %c0_71 = arith.constant 0 : index
    %77 = vector.load %arg5[%c0_69, %c0_70, %c0_71] : memref<1x16x128xf32, #tpu.memory_space<vmem>>, vector<1x8x128xf32>
    %78 = vector.shape_cast %77 : vector<1x8x128xf32> to vector<8x128xf32>
    %79 = vector.shape_cast %76 : vector<8x128xf32> to vector<1x8x128xf32>
    tpu.vector_store %arg5[%c0_69, %c0_70, %c0_71], %79 {strides = array<i32>} : memref<1x16x128xf32, #tpu.memory_space<vmem>>, vector<1x8x128xf32>,
    %80 = vector.extract_strided_slice %65 {offsets = [8, 0], sizes = [8, 128], strides = [1, 1]} : vector<16x128xf32> to vector<8x128xf32>
    %c0_72 = arith.constant 0 : index
    %c1_73 = arith.constant 1 : index
    %c0_74 = arith.constant 0 : index
    %c0_75 = arith.constant 0 : index
    %81 = vector.load %arg3[%c0_72, %c1_73, %c0_74, %c0_75] : memref<1x2x128x128xf32, #tpu.memory_space<vmem>>, vector<1x1x128x128xf32>
    %82 = vector.shape_cast %81 : vector<1x1x128x128xf32> to vector<128x128xf32>
    %cst_76 = arith.constant dense<0.000000e+00> : vector<8x128xf32>
    %83 = tpu.matmul %80, %82, %cst_76 {dimension_numbers = #tpu.dot_dimension_numbers<[1], [0], [0], [1], [0, 0, 1, 1], [], []>} : vector<8x128xf32>, vector<128x128xf32>, vector<8x128xf32> -> vector<8x128xf32>
    %84 = vector.shape_cast %67 : vector<128xf32> to vector<1x128xf32>
    %85 = vector.broadcast %84 : vector<1x128xf32> to vector<8x128xf32>
    %86 = arith.addf %83, %85 : vector<8x128xf32>
    %87 = vector.extract_strided_slice %1 {offsets = [8, 0], sizes = [8, 128], strides = [1, 1]} : vector<16x128xf32> to vector<8x128xf32>
    %88 = arith.addf %86, %87 : vector<8x128xf32>
    %c0_77 = arith.constant 0 : index
    %c8_78 = arith.constant 8 : index
    %c0_79 = arith.constant 0 : index
    %89 = vector.load %arg5[%c0_77, %c8_78, %c0_79] : memref<1x16x128xf32, #tpu.memory_space<vmem>>, vector<1x8x128xf32>
    %90 = vector.shape_cast %89 : vector<1x8x128xf32> to vector<8x128xf32>
    %91 = vector.shape_cast %88 : vector<8x128xf32> to vector<1x8x128xf32>
    tpu.vector_store %arg5[%c0_77, %c8_78, %c0_79], %91 {strides = array<i32>} : memref<1x16x128xf32, #tpu.memory_space<vmem>>, vector<1x8x128xf32>,
    return
  }
  func.func @transform_0(%arg0: i32) -> (i32, i32, i32) {
    %c0_i32 = arith.constant 0 : i32
    %c0_i32_0 = arith.constant 0 : i32
    %c0_i32_1 = arith.constant 0 : i32
    return %arg0, %c0_i32, %c0_i32_0 : i32, i32, i32
  }
  func.func @transform_1(%arg0: i32) -> (i32, i32, i32, i32) {
    %c0_i32 = arith.constant 0 : i32
    %c0_i32_0 = arith.constant 0 : i32
    %c0_i32_1 = arith.constant 0 : i32
    %c0_i32_2 = arith.constant 0 : i32
    return %arg0, %c0_i32, %c0_i32_0, %c0_i32_1 : i32, i32, i32, i32
  }
  func.func @transform_2(%arg0: i32) -> (i32, i32, i32, i32) {
    %c0_i32 = arith.constant 0 : i32
    %c0_i32_0 = arith.constant 0 : i32
    %c0_i32_1 = arith.constant 0 : i32
    %c0_i32_2 = arith.constant 0 : i32
    return %arg0, %c0_i32, %c0_i32_0, %c0_i32_1 : i32, i32, i32, i32
  }
  func.func @transform_3(%arg0: i32) -> (i32, i32) {
    %c0_i32 = arith.constant 0 : i32
    %c0_i32_0 = arith.constant 0 : i32
    %c0_i32_1 = arith.constant 0 : i32
    return %c0_i32, %c0_i32_0 : i32, i32
  }
  func.func @transform_4(%arg0: i32) -> (i32, i32, i32) {
    %c0_i32 = arith.constant 0 : i32
    %c0_i32_0 = arith.constant 0 : i32
    %c0_i32_1 = arith.constant 0 : i32
    return %arg0, %c0_i32, %c0_i32_0 : i32, i32, i32
  }
}

</mosaic_0001>

<llo_original>
// kernel: tpu_custom_call.1
$region0: #{tpu_custom_call.1}
  #allocation0 [shape = 'u32[]', space=smem, size = 0x4, offset = 0x4, fixed_abs, tag = 'smem constant byte address 0x4 - core index']
  #allocation1 [shape = 'u32[144,128]{1,0:T(1,128)}', space=vmem, size = 0x12000, scoped, tag = 'internal scratch']
  #allocation2 [shape = 'f32[18,144]{1,0:T(8,128)}', space=vmem, size = 0x6000, scoped, tag = 'scratch operand']
  %s0 = inlined_call_operand.hbm [shape: f32[2,16,128], index: 0, kind: input, shape index: {}]
  %s1 = inlined_call_operand.hbm [shape: f32[2,9,16,128], index: 1, kind: input, shape index: {}]
  %s2 = inlined_call_operand.hbm [shape: f32[2,2,128,128], index: 2, kind: input, shape index: {}]
  %s3 = inlined_call_operand.vmem [shape: f32[2,128], index: 3, kind: input, shape index: {}]
  %s4 = inlined_call_operand.hbm [shape: f32[2,16,128], index: 4, kind: output, shape index: {}]
  %s5 = sld [smem:[#allocation0]]
  $region61: #{tpu_custom_call.1} parent=0
    _
  %s7 = ssub.s32 1, %s5
  %s8 = scalar_select 0, %s7, %s5
  $region1: #{tpu_custom_call.1} parent=0
    #allocation3 [shape = 'u8[16384]{0}', space=vmem, size = 0x4000, scoped, tag = 'input window, operand 0']
    #allocation4 [shape = 's32[2]{0}', space=sflag, size = 0x8, scoped, tag = 'scoped memory for tpu_custom_call.1']
    #allocation5 [shape = 's32[2]{0}', space=sflag, size = 0x8, scoped, tag = 'scoped memory for tpu_custom_call.1']
    #allocation6 [shape = 'u8[147456]{0}', space=vmem, size = 0x24000, scoped, tag = 'input window, operand 1']
    #allocation7 [shape = 's32[2]{0}', space=sflag, size = 0x8, scoped, tag = 'scoped memory for tpu_custom_call.1']
    #allocation8 [shape = 'u8[262144]{0}', space=vmem, size = 0x40000, scoped, tag = 'input window, operand 2']
    #allocation9 [shape = 'u8[16384]{0}', space=vmem, size = 0x4000, scoped, tag = 'output window, operand 0']
    %9 = vsyncpa [#allocation4], 0
    %s10 = scalar_lea.sflag [#allocation4], 1
    %11 = vsyncpa %s10, 0
    %12 = vsyncpa [#allocation7], 0
    %s13 = scalar_lea.sflag [#allocation7], 1
    %14 = vsyncpa %s13, 0
    %15 = vsyncpa [#allocation5], 0
    %s16 = scalar_lea.sflag [#allocation5], 1
    %17 = vsyncpa %s16, 0
    loop: start=0, step=1, limit=4
    $region2: #{tpu_custom_call.1} parent=1 // loop_pre_header
      _
    $region3: #{tpu_custom_call.1} parent=1 // loop_header
      %s19 = sphi 0, %s23
      %p20 = scmp.ge.s32.totalorder %s19, 4
      %s29 = sphi 0, %s31
      %s32 = sphi 0, %s29
      %s33 = sphi 0, %s32
      %s49 = sphi 0, %s33
      %s55 = sphi 0, %s57
      %s58 = sphi 0, %s55
      %s59 = sphi 0, %s58
      %s75 = sphi 0, %s59
      %s81 = sphi 0, %s83
      %s84 = sphi 0, %s81
      %s85 = sphi 0, %s84
      %s101 = sphi 0, %s85
      %s105 = sphi 0, %s105
      %s107 = sphi 0, %s105
      %s108 = sphi 0, %s107
      %s122 = sphi 0, %s108
      %s128 = sphi 0, %s130
      %s131 = sphi 0, %s128
      %s132 = sphi 0, %s131
      %s148 = sphi 0, %s132
    $region4: #{tpu_custom_call.1} parent=1 // loop_header_branch
      %22 = sbr.rel (%p20) target = $region8
    $region5: #{tpu_custom_call.1} parent=1 // loop_body
      %s24 = ssub.s32 %s19, 1
      %s25 = ssub.s32 %s19, 2
      %s26 = sadd.s32 %s19, 1
      %s27 = ssub.s32 %s19, %s26
      %p28 = scmp.eq.s32.totalorder %s27, 0
      %s30 = sadd.s32 %s29, 1
      %s31 = scalar_select %p28, %s29, %s30
      %p34 = pneg %p28
      %p35 = scmp.eq.s32.totalorder %s19, 1
      %p36 = por %p34, %p35
      %p37 = scmp.ne.s32.totalorder %s29, %s32
      %p38 = scmp.eq.s32.totalorder %s19, 0
      %p39 = por %p37, %p38
      %p40 = scmp.ne.s32.totalorder %s29, %s32
      %p41 = scmp.eq.s32.totalorder %s24, 1
      %p42 = por %p40, %p41
      %p43 = scmp.ne.s32.totalorder %s32, %s33
      %p44 = scmp.eq.s32.totalorder %s24, 0
      %p45 = por %p43, %p44
      %p46 = scmp.ne.s32.totalorder %s32, %s33
      %p47 = scmp.eq.s32.totalorder %s25, 1
      %p48 = por %p46, %p47
      %p50 = scmp.ne.s32.totalorder %s33, %s49
      %p51 = scmp.eq.s32.totalorder %s25, 0
      %p52 = por %p50, %p51
      %s53 = ssub.s32 %s19, %s26
      %p54 = scmp.eq.s32.totalorder %s53, 0
      %s56 = sadd.s32 %s55, 1
      %s57 = scalar_select %p54, %s55, %s56
      %p60 = pneg %p54
      %p61 = scmp.eq.s32.totalorder %s19, 1
      %p62 = por %p60, %p61
      %p63 = scmp.ne.s32.totalorder %s55, %s58
      %p64 = scmp.eq.s32.totalorder %s19, 0
      %p65 = por %p63, %p64
      %p66 = scmp.ne.s32.totalorder %s55, %s58
      %p67 = scmp.eq.s32.totalorder %s24, 1
      %p68 = por %p66, %p67
      %p69 = scmp.ne.s32.totalorder %s58, %s59
      %p70 = scmp.eq.s32.totalorder %s24, 0
      %p71 = por %p69, %p70
      %p72 = scmp.ne.s32.totalorder %s58, %s59
      %p73 = scmp.eq.s32.totalorder %s25, 1
      %p74 = por %p72, %p73
      %p76 = scmp.ne.s32.totalorder %s59, %s75
      %p77 = scmp.eq.s32.totalorder %s25, 0
      %p78 = por %p76, %p77
      %s79 = ssub.s32 %s19, %s26
      %p80 = scmp.eq.s32.totalorder %s79, 0
      %s82 = sadd.s32 %s81, 1
      %s83 = scalar_select %p80, %s81, %s82
      %p86 = pneg %p80
      %p87 = scmp.eq.s32.totalorder %s19, 1
      %p88 = por %p86, %p87
      %p89 = scmp.ne.s32.totalorder %s81, %s84
      %p90 = scmp.eq.s32.totalorder %s19, 0
      %p91 = por %p89, %p90
      %p92 = scmp.ne.s32.totalorder %s81, %s84
      %p93 = scmp.eq.s32.totalorder %s24, 1
      %p94 = por %p92, %p93
      %p95 = scmp.ne.s32.totalorder %s84, %s85
      %p96 = scmp.eq.s32.totalorder %s24, 0
      %p97 = por %p95, %p96
      %p98 = scmp.ne.s32.totalorder %s84, %s85
      %p99 = scmp.eq.s32.totalorder %s25, 1
      %p100 = por %p98, %p99
      %p102 = scmp.ne.s32.totalorder %s85, %s101
      %p103 = scmp.eq.s32.totalorder %s25, 0
      %p104 = por %p102, %p103
      %s106 = sadd.s32 %s105, 1
      %p109 = scmp.eq.s32.totalorder %s19, 1
      %p110 = scmp.ne.s32.totalorder %s105, %s107
      %p111 = scmp.eq.s32.totalorder %s19, 0
      %p112 = por %p110, %p111
      %p113 = scmp.ne.s32.totalorder %s105, %s107
      %p114 = scmp.eq.s32.totalorder %s24, 1
      %p115 = por %p113, %p114
      %p116 = scmp.ne.s32.totalorder %s107, %s108
      %p117 = scmp.eq.s32.totalorder %s24, 0
      %p118 = por %p116, %p117
      %p119 = scmp.ne.s32.totalorder %s107, %s108
      %p120 = scmp.eq.s32.totalorder %s25, 1
      %p121 = por %p119, %p120
      %p123 = scmp.ne.s32.totalorder %s108, %s122
      %p124 = scmp.eq.s32.totalorder %s25, 0
      %p125 = por %p123, %p124
      %s126 = ssub.s32 %s19, %s26
      %p127 = scmp.eq.s32.totalorder %s126, 0
      %s129 = sadd.s32 %s128, 1
      %s130 = scalar_select %p127, %s128, %s129
      %p133 = pneg %p127
      %p134 = scmp.eq.s32.totalorder %s19, 1
      %p135 = por %p133, %p134
      %p136 = scmp.ne.s32.totalorder %s128, %s131
      %p137 = scmp.eq.s32.totalorder %s19, 0
      %p138 = por %p136, %p137
      %p139 = scmp.ne.s32.totalorder %s128, %s131
      %p140 = scmp.eq.s32.totalorder %s24, 1
      %p141 = por %p139, %p140
      %p142 = scmp.ne.s32.totalorder %s131, %s132
      %p143 = scmp.eq.s32.totalorder %s24, 0
      %p144 = por %p142, %p143
      %p145 = scmp.ne.s32.totalorder %s131, %s132
      %p146 = scmp.eq.s32.totalorder %s25, 1
      %p147 = por %p145, %p146
      %p149 = scmp.ne.s32.totalorder %s132, %s148
      %p150 = scmp.eq.s32.totalorder %s25, 0
      %p151 = por %p149, %p150
      %p152 = scmp.le.s32.totalorder 1, %s19
      %p153 = scmp.lt.s32.totalorder %s19, 3
      %p154 = pnand %p152, %p153
      %p155 = pneg %p154
      // Predicated region
      $region9: #{tpu_custom_call.1} parent=5 // pred_check
        _
      $region10: #{tpu_custom_call.1} parent=5 // pred_check_branch
        %157 = sbr.rel (%p154) target = $region12
      $region11: #{tpu_custom_call.1} parent=5 // pred_region
        %s158 = ssub.s32 %s19, 1
        // Predicated region
        $region13: #{tpu_custom_call.1} parent=11 // pred_check
          %p159 = pneg %p118
        $region14: #{tpu_custom_call.1} parent=11 // pred_check_branch
          %161 = sbr.rel (%p159) target = $region16
        $region15: #{tpu_custom_call.1} parent=11 // pred_region
          _
        $region16: #{tpu_custom_call.1} parent=11 // pred_fallthru
          _
      $region12: #{tpu_custom_call.1} parent=5 // pred_fallthru
        _
      %p162 = scmp.lt.s32.totalorder %s19, 2
      // Predicated region
      $region17: #{tpu_custom_call.1} parent=5 // pred_check
        %p163 = pneg %p162
      $region18: #{tpu_custom_call.1} parent=5 // pred_check_branch
        %165 = sbr.rel (%p163) target = $region20
      $region19: #{tpu_custom_call.1} parent=5 // pred_region
        // Predicated region
        $region21: #{tpu_custom_call.1} parent=19 // pred_check
          %p166 = pneg %p39
        $region22: #{tpu_custom_call.1} parent=19 // pred_check_branch
          %168 = sbr.rel (%p166) target = $region24
        $region23: #{tpu_custom_call.1} parent=19 // pred_region
          %s169 = sand.u32 %s29, 1
          %s170 = scalar_lea.sflag [#allocation4], %s169
          %s171 = sand.u32 %s29, 1
          %s172 = smul.addr %s171, 16
          %s173 = scalar_lea.vmem [#allocation3], %s172
          %s175 = ssub.s32 256, 256
          %176 = vsyncadd %s170, %s175
          %s177 = smul.addr %s19, 2
          %s178 = smul.addr %s177, 128
          %s179 = scalar_lea.hbm %s0, %s178
          %s180 = sshll.u32 %s173, 4
          %s181 = int_to_ptr.vmem [resolvable:$true] %s180
          %186 = dma.hbm_to_vmem [thread:$0]  %s179, 256, %s181, %s170, 128, 128, 8
        $region24: #{tpu_custom_call.1} parent=19 // pred_fallthru
          _
        // Predicated region
        $region25: #{tpu_custom_call.1} parent=19 // pred_check
          %p187 = pneg %p65
        $region26: #{tpu_custom_call.1} parent=19 // pred_check_branch
          %189 = sbr.rel (%p187) target = $region28
        $region27: #{tpu_custom_call.1} parent=19 // pred_region
          %s190 = sand.u32 %s19, 1
          %s191 = scalar_lea.sflag [#allocation7], %s190
          %s192 = sand.u32 %s55, 1
          %s193 = smul.addr %s192, 144
          %s194 = scalar_lea.vmem [#allocation6], %s193
          %s196 = ssub.s32 2304, 2304
          %197 = vsyncadd %s191, %s196
          %s198 = smul.addr %s19, 18
          %s199 = smul.addr %s198, 128
          %s200 = scalar_lea.hbm %s1, %s199
          %s201 = sshll.u32 %s194, 4
          %s202 = int_to_ptr.vmem [resolvable:$true] %s201
          %207 = dma.hbm_to_vmem [thread:$0]  %s200, 2304, %s202, %s191, 128, 128, 8
        $region28: #{tpu_custom_call.1} parent=19 // pred_fallthru
          _
        // Predicated region
        $region29: #{tpu_custom_call.1} parent=19 // pred_check
          %p208 = pneg %p91
        $region30: #{tpu_custom_call.1} parent=19 // pred_check_branch
          %210 = sbr.rel (%p208) target = $region32
        $region31: #{tpu_custom_call.1} parent=19 // pred_region
          %s211 = sand.u32 %s19, 1
          %s212 = scalar_lea.sflag [#allocation7], %s211
          %s213 = sand.u32 %s81, 1
          %s214 = smul.addr %s213, 256
          %s215 = scalar_lea.vmem [#allocation8], %s214
          %s217 = ssub.s32 4096, 4096
          %218 = vsyncadd %s212, %s217
          %s219 = smul.addr %s19, 32
          %s220 = smul.addr %s219, 128
          %s221 = scalar_lea.hbm %s2, %s220
          %s222 = sshll.u32 %s215, 4
          %s223 = int_to_ptr.vmem [resolvable:$true] %s222
          %228 = dma.hbm_to_vmem [thread:$0]  %s221, 4096, %s223, %s212, 128, 128, 8
        $region32: #{tpu_custom_call.1} parent=19 // pred_fallthru
          _
      $region20: #{tpu_custom_call.1} parent=5 // pred_fallthru
        _
      %p229 = scmp.le.s32.totalorder 1, %s19
      %p230 = scmp.lt.s32.totalorder %s19, 3
      %p231 = pnand %p229, %p230
      %p232 = pneg %p231
      // Predicated region
      $region33: #{tpu_custom_call.1} parent=5 // pred_check
        _
      $region34: #{tpu_custom_call.1} parent=5 // pred_check_branch
        %234 = sbr.rel (%p231) target = $region36
      $region35: #{tpu_custom_call.1} parent=5 // pred_region
        %s235 = ssub.s32 %s19, 1
        %s236 = sand.u32 %s32, 1
        %s237 = scalar_lea.sflag [#allocation4], %s236
        %s238 = sand.u32 %s32, 1
        %s239 = smul.addr %s238, 16
        %s240 = scalar_lea.vmem [#allocation3], %s239
        // Predicated region
        $region37: #{tpu_custom_call.1} parent=35 // pred_check
          %p241 = pneg %p45
        $region38: #{tpu_custom_call.1} parent=35 // pred_check_branch
          %243 = sbr.rel (%p241) target = $region40
        $region39: #{tpu_custom_call.1} parent=35 // pred_region
          %244 = dma.done %s237, 256
        $region40: #{tpu_custom_call.1} parent=35 // pred_fallthru
          _
        %s245 = sand.u32 %s24, 1
        %s246 = scalar_lea.sflag [#allocation7], %s245
        %s247 = sand.u32 %s58, 1
        %s248 = smul.addr %s247, 144
        %s249 = scalar_lea.vmem [#allocation6], %s248
        // Predicated region
        $region41: #{tpu_custom_call.1} parent=35 // pred_check
          %p250 = pneg %p71
        $region42: #{tpu_custom_call.1} parent=35 // pred_check_branch
          %252 = sbr.rel (%p250) target = $region44
        $region43: #{tpu_custom_call.1} parent=35 // pred_region
          %253 = dma.done %s246, 2304
        $region44: #{tpu_custom_call.1} parent=35 // pred_fallthru
          _
        %s254 = sand.u32 %s24, 1
        %s255 = scalar_lea.sflag [#allocation7], %s254
        %s256 = sand.u32 %s84, 1
        %s257 = smul.addr %s256, 256
        %s258 = scalar_lea.vmem [#allocation8], %s257
        // Predicated region
        $region45: #{tpu_custom_call.1} parent=35 // pred_check
          %p259 = pneg %p97
        $region46: #{tpu_custom_call.1} parent=35 // pred_check_branch
          %261 = sbr.rel (%p259) target = $region48
        $region47: #{tpu_custom_call.1} parent=35 // pred_region
          %262 = dma.done %s255, 4096
        $region48: #{tpu_custom_call.1} parent=35 // pred_fallthru
          _
        %s263 = sand.u32 %s32, 1
        %s264 = scalar_lea.sflag [#allocation4], %s263
        %s265 = sand.u32 %s32, 1
        %s266 = smul.addr %s265, 16
        %s267 = scalar_lea.vmem [#allocation3], %s266
        %p268 = pneg %p45
        %p269 = pneg %p42
        %s270 = sand.u32 %s24, 1
        %s271 = scalar_lea.sflag [#allocation7], %s270
        %s272 = sand.u32 %s58, 1
        %s273 = smul.addr %s272, 144
        %s274 = scalar_lea.vmem [#allocation6], %s273
        %p275 = pneg %p71
        %p276 = pneg %p68
        %s277 = sand.u32 %s24, 1
        %s278 = scalar_lea.sflag [#allocation7], %s277
        %s279 = sand.u32 %s84, 1
        %s280 = smul.addr %s279, 256
        %s281 = scalar_lea.vmem [#allocation8], %s280
        %p282 = pneg %p97
        %p283 = pneg %p94
        %p284 = pneg %p118
        %p285 = pneg %p115
        %p286 = pneg %p144
        %p287 = pneg %p141
        %s288 = sand.u32 %s131, 1
        %s289 = scalar_lea.sflag [#allocation5], %s288
        %s290 = sand.u32 %s131, 1
        %s291 = smul.addr %s290, 16
        %s292 = scalar_lea.vmem [#allocation9], %s291
        %v293 = vld [vmem:[%s240] sm:$0xff]
        %v294 = vld [vmem:[%s240 + $0x8] sm:$0xff]
        %vm297 = vcmask 1040384
        %v298 = vrot.slane %v293, 7
        %v299 = vrot.slane %v294, 7
        %v300 = vsel %vm297, %v298, %v299
        %301 = vrot.lane.b32.xlu0 %v298, 8
        %v302 = vpop.permute.xlu0 %301
        %303 = vrot.lane.b32.xlu0 %v300, 8
        %v304 = vpop.permute.xlu0 %303
        %305 = vrot.lane.b32.xlu0 %v299, 8
        %v306 = vpop.permute.xlu0 %305
        %vm310 = vcmask 1047617
        %311 = vst.msk [vmem:[#allocation2] sm:$0xfe] %vm310, %v302
        %vm312 = vcmask 64513
        %313 = vst.msk [vmem:[#allocation2 + $0x8] sm:$0xfe] %vm312, %v302
        %vm314 = vcmask 1047616
        %315 = vst.msk [vmem:[#allocation2 + $0x10] sm:$0xff] %vm314, %v304
        %vm316 = vcmask 64512
        %317 = vst.msk [vmem:[#allocation2 + $0x18] sm:$0xff] %vm316, %v304
        %vm318 = vcmask 1040448
        %319 = vst.msk [vmem:[#allocation2 + $0x20] sm:$0x1] %vm318, %v306
        %vm320 = vcmask 57344
        %321 = vst.msk [vmem:[#allocation2 + $0x28] sm:$0x1] %vm320, %v306
        %322 = vrot.lane.b32.xlu0 %v298, 120
        %v323 = vpop.permute.xlu0 %322
        %324 = vrot.lane.b32.xlu0 %v300, 120
        %v325 = vpop.permute.xlu0 %324
        %326 = vrot.lane.b32.xlu0 %v299, 120
        %v327 = vpop.permute.xlu0 %326
        %331 = vst.msk [vmem:[#allocation2] sm:$0xfe] %vm312, %v323
        %332 = vst.msk [vmem:[#allocation2 + $0x10] sm:$0xff] %vm316, %v325
        %333 = vst.msk [vmem:[#allocation2 + $0x20] sm:$0x1] %vm320, %v327
        %334 = vrot.lane.b32.xlu0 %v298, 24
        %v335 = vpop.permute.xlu0 %334
        %336 = vrot.lane.b32.xlu0 %v300, 24
        %v337 = vpop.permute.xlu0 %336
        %338 = vrot.lane.b32.xlu0 %v299, 24
        %v339 = vpop.permute.xlu0 %338
        %vm343 = vcmask 130113
        %344 = vst.msk [vmem:[#allocation2 + $0x8] sm:$0xfe] %vm343, %v335
        %vm345 = vcmask 130112
        %346 = vst.msk [vmem:[#allocation2 + $0x18] sm:$0xff] %vm345, %v337
        %vm347 = vcmask 122944
        %348 = vst.msk [vmem:[#allocation2 + $0x28] sm:$0x1] %vm347, %v339
        %s349 = scalar_lea.vmem [#allocation2], 2
        %v350 = vld [vmem:[%s349] ss:$8 sm:$0x3]
        %v351 = vlaneseq
        %vm352 = vcmp.ge.s32.totalorder %v351, 0
        %vm353 = vcmp.lt.s32.totalorder %v351, 144
        %vm354 = vmand %vm352, %vm353
        %355 = vst.msk [vmem:[#allocation2] ss:$8 sm:$0x3] %vm354, %v350
        %356 = vst.msk [vmem:[#allocation2] ss:$8 sm:$0x0] %vm354, %v350
        %s357 = scalar_lea.vmem [#allocation2], 23
        %v358 = vld [vmem:[%s357] ss:$8 sm:$0x3]
        %s359 = scalar_lea.vmem [#allocation2], 33
        %360 = vst.msk [vmem:[%s359] ss:$8 sm:$0x3] %vm354, %v358
        %361 = vst.msk [vmem:[%s359] ss:$8 sm:$0x0] %vm354, %v358
        %v362 = vld [vmem:[#allocation2] sm:$0xff]
        %v363 = vld [vmem:[#allocation2 + $0x10] sm:$0xff]
        %v364 = vld [vmem:[%s249] sm:$0xff]
        %v365 = vld [vmem:[%s249 + $0x8] sm:$0xff]
        %v366 = vmul.f32 %v362, %v364
        %v367 = vmul.f32 %v363, %v365
        %v368 = vadd.f32 %v366, 0.0
        %v369 = vadd.f32 %v367, 0.0
        %v370 = vld [vmem:[#allocation2 + $0x8] sm:$0xff]
        %v371 = vld [vmem:[#allocation2 + $0x18] sm:$0xff]
        %s372 = scalar_lea.vmem %s249, 16 [#allocation6]
        %v373 = vld [vmem:[%s372] sm:$0xff]
        %v374 = vld [vmem:[%s372 + $0x8] sm:$0xff]
        %377 = vrot.lane.b32.xlu0 %v373, 8
        %v378 = vpop.permute.xlu0 %377
        %379 = vrot.lane.b32.xlu0 %v374, 8
        %v380 = vpop.permute.xlu0 %379
        %v383 = vmul.f32 %v362, %v378
        %v384 = vmul.f32 %v370, %v378
        %v385 = vmul.f32 %v363, %v380
        %v386 = vmul.f32 %v371, %v380
        %391 = vrot.lane.b32.xlu0 %v383, 120
        %v392 = vpop.permute.xlu0 %391
        %393 = vrot.lane.b32.xlu0 %v384, 120
        %v394 = vpop.permute.xlu0 %393
        %395 = vrot.lane.b32.xlu0 %v385, 120
        %v396 = vpop.permute.xlu0 %395
        %397 = vrot.lane.b32.xlu0 %v386, 120
        %v398 = vpop.permute.xlu0 %397
        %vm399 = vcmask 982016
        %v400 = vsel %vm399, %v392, %v394
        %v401 = vsel %vm399, %v396, %v398
        %v404 = vadd.f32 %v368, %v400
        %v405 = vadd.f32 %v369, %v401
        %s406 = scalar_lea.vmem %s249, 32 [#allocation6]
        %v407 = vld [vmem:[%s406] sm:$0xff]
        %v408 = vld [vmem:[%s406 + $0x8] sm:$0xff]
        %411 = vrot.lane.b32.xlu0 %v407, 16
        %v412 = vpop.permute.xlu0 %411
        %413 = vrot.lane.b32.xlu0 %v408, 16
        %v414 = vpop.permute.xlu0 %413
        %v417 = vmul.f32 %v362, %v412
        %v418 = vmul.f32 %v370, %v412
        %v419 = vmul.f32 %v363, %v414
        %v420 = vmul.f32 %v371, %v414
        %425 = vrot.lane.b32.xlu0 %v417, 112
        %v426 = vpop.permute.xlu0 %425
        %427 = vrot.lane.b32.xlu0 %v418, 112
        %v428 = vpop.permute.xlu0 %427
        %429 = vrot.lane.b32.xlu0 %v419, 112
        %v430 = vpop.permute.xlu0 %429
        %431 = vrot.lane.b32.xlu0 %v420, 112
        %v432 = vpop.permute.xlu0 %431
        %vm433 = vcmask 916480
        %v434 = vsel %vm433, %v426, %v428
        %v435 = vsel %vm433, %v430, %v432
        %v438 = vadd.f32 %v404, %v434
        %v439 = vadd.f32 %v405, %v435
        %v440 = vld [vmem:[#allocation2] sm:$0xfe]
        %v441 = vld [vmem:[#allocation2 + $0x20] sm:$0x1]
        %s442 = scalar_lea.vmem %s249, 48 [#allocation6]
        %v443 = vld [vmem:[%s442] sm:$0xff]
        %v444 = vld [vmem:[%s442 + $0x8] sm:$0xff]
        %v447 = vrot.slane %v443, 7
        %v448 = vrot.slane %v444, 7
        %v449 = vsel %vm297, %v447, %v448
        %v453 = vmul.f32 %v440, %v447
        %v454 = vmul.f32 %v363, %v449
        %v455 = vmul.f32 %v441, %v448
        %vm459 = vcmask 1046528
        %v460 = vrot.slane %v453, 1
        %v461 = vrot.slane %v454, 1
        %v462 = vsel %vm459, %v460, %v461
        %v463 = vrot.slane %v455, 1
        %v464 = vsel %vm459, %v461, %v463
        %v467 = vadd.f32 %v438, %v462
        %v468 = vadd.f32 %v439, %v464
        %v469 = vld [vmem:[#allocation2 + $0x8] sm:$0xfe]
        %v470 = vld [vmem:[#allocation2 + $0x28] sm:$0x1]
        %s471 = scalar_lea.vmem %s249, 64 [#allocation6]
        %v472 = vld [vmem:[%s471] sm:$0xff]
        %v473 = vld [vmem:[%s471 + $0x8] sm:$0xff]
        %v476 = vrot.slane %v472, 7
        %v477 = vrot.slane %v473, 7
        %v478 = vsel %vm297, %v476, %v477
        %479 = vrot.lane.b32.xlu0 %v476, 8
        %v480 = vpop.permute.xlu0 %479
        %481 = vrot.lane.b32.xlu0 %v478, 8
        %v482 = vpop.permute.xlu0 %481
        %483 = vrot.lane.b32.xlu0 %v477, 8
        %v484 = vpop.permute.xlu0 %483
        %v488 = vmul.f32 %v440, %v480
        %v489 = vmul.f32 %v469, %v480
        %v490 = vmul.f32 %v363, %v482
        %v491 = vmul.f32 %v371, %v482
        %v492 = vmul.f32 %v441, %v484
        %v493 = vmul.f32 %v470, %v484
        %v500 = vrot.slane %v488, 1
        %v501 = vrot.slane %v490, 1
        %v502 = vsel %vm459, %v500, %v501
        %v503 = vrot.slane %v489, 1
        %v504 = vrot.slane %v491, 1
        %v505 = vsel %vm459, %v503, %v504
        %v506 = vrot.slane %v492, 1
        %v507 = vsel %vm459, %v501, %v506
        %v508 = vrot.slane %v493, 1
        %v509 = vsel %vm459, %v504, %v508
        %510 = vrot.lane.b32.xlu0 %v502, 120
        %v511 = vpop.permute.xlu0 %510
        %512 = vrot.lane.b32.xlu0 %v505, 120
        %v513 = vpop.permute.xlu0 %512
        %514 = vrot.lane.b32.xlu0 %v507, 120
        %v515 = vpop.permute.xlu0 %514
        %516 = vrot.lane.b32.xlu0 %v509, 120
        %v517 = vpop.permute.xlu0 %516
        %v518 = vsel %vm399, %v511, %v513
        %v519 = vsel %vm399, %v515, %v517
        %v522 = vadd.f32 %v467, %v518
        %v523 = vadd.f32 %v468, %v519
        %s524 = scalar_lea.vmem %s249, 80 [#allocation6]
        %v525 = vld [vmem:[%s524] sm:$0xff]
        %v526 = vld [vmem:[%s524 + $0x8] sm:$0xff]
        %v529 = vrot.slane %v525, 7
        %v530 = vrot.slane %v526, 7
        %v531 = vsel %vm297, %v529, %v530
        %532 = vrot.lane.b32.xlu0 %v529, 16
        %v533 = vpop.permute.xlu0 %532
        %534 = vrot.lane.b32.xlu0 %v531, 16
        %v535 = vpop.permute.xlu0 %534
        %536 = vrot.lane.b32.xlu0 %v530, 16
        %v537 = vpop.permute.xlu0 %536
        %v541 = vmul.f32 %v440, %v533
        %v542 = vmul.f32 %v469, %v533
        %v543 = vmul.f32 %v363, %v535
        %v544 = vmul.f32 %v371, %v535
        %v545 = vmul.f32 %v441, %v537
        %v546 = vmul.f32 %v470, %v537
        %v553 = vrot.slane %v541, 1
        %v554 = vrot.slane %v543, 1
        %v555 = vsel %vm459, %v553, %v554
        %v556 = vrot.slane %v542, 1
        %v557 = vrot.slane %v544, 1
        %v558 = vsel %vm459, %v556, %v557
        %v559 = vrot.slane %v545, 1
        %v560 = vsel %vm459, %v554, %v559
        %v561 = vrot.slane %v546, 1
        %v562 = vsel %vm459, %v557, %v561
        %563 = vrot.lane.b32.xlu0 %v555, 112
        %v564 = vpop.permute.xlu0 %563
        %565 = vrot.lane.b32.xlu0 %v558, 112
        %v566 = vpop.permute.xlu0 %565
        %567 = vrot.lane.b32.xlu0 %v560, 112
        %v568 = vpop.permute.xlu0 %567
        %569 = vrot.lane.b32.xlu0 %v562, 112
        %v570 = vpop.permute.xlu0 %569
        %v571 = vsel %vm433, %v564, %v566
        %v572 = vsel %vm433, %v568, %v570
        %v575 = vadd.f32 %v522, %v571
        %v576 = vadd.f32 %v523, %v572
        %v577 = vld [vmem:[#allocation2] sm:$0xfc]
        %v578 = vld [vmem:[#allocation2 + $0x20] sm:$0x3]
        %s579 = scalar_lea.vmem %s249, 96 [#allocation6]
        %v580 = vld [vmem:[%s579] sm:$0xff]
        %v581 = vld [vmem:[%s579 + $0x8] sm:$0xff]
        %vm584 = vcmask 1041408
        %v585 = vrot.slane %v580, 6
        %v586 = vrot.slane %v581, 6
        %v587 = vsel %vm584, %v585, %v586
        %v591 = vmul.f32 %v577, %v585
        %v592 = vmul.f32 %v363, %v587
        %v593 = vmul.f32 %v578, %v586
        %vm597 = vcmask 1045504
        %v598 = vrot.slane %v591, 2
        %v599 = vrot.slane %v592, 2
        %v600 = vsel %vm597, %v598, %v599
        %v601 = vrot.slane %v593, 2
        %v602 = vsel %vm597, %v599, %v601
        %v605 = vadd.f32 %v575, %v600
        %v606 = vadd.f32 %v576, %v602
        %v607 = vld [vmem:[#allocation2 + $0x8] sm:$0xfc]
        %v608 = vld [vmem:[#allocation2 + $0x28] sm:$0x3]
        %s609 = scalar_lea.vmem %s249, 112 [#allocation6]
        %v610 = vld [vmem:[%s609] sm:$0xff]
        %v611 = vld [vmem:[%s609 + $0x8] sm:$0xff]
        %v614 = vrot.slane %v610, 6
        %v615 = vrot.slane %v611, 6
        %v616 = vsel %vm584, %v614, %v615
        %617 = vrot.lane.b32.xlu0 %v614, 8
        %v618 = vpop.permute.xlu0 %617
        %619 = vrot.lane.b32.xlu0 %v616, 8
        %v620 = vpop.permute.xlu0 %619
        %621 = vrot.lane.b32.xlu0 %v615, 8
        %v622 = vpop.permute.xlu0 %621
        %v626 = vmul.f32 %v577, %v618
        %v627 = vmul.f32 %v607, %v618
        %v628 = vmul.f32 %v363, %v620
        %v629 = vmul.f32 %v371, %v620
        %v630 = vmul.f32 %v578, %v622
        %v631 = vmul.f32 %v608, %v622
        %v638 = vrot.slane %v626, 2
        %v639 = vrot.slane %v628, 2
        %v640 = vsel %vm597, %v638, %v639
        %v641 = vrot.slane %v627, 2
        %v642 = vrot.slane %v629, 2
        %v643 = vsel %vm597, %v641, %v642
        %v644 = vrot.slane %v630, 2
        %v645 = vsel %vm597, %v639, %v644
        %v646 = vrot.slane %v631, 2
        %v647 = vsel %vm597, %v642, %v646
        %648 = vrot.lane.b32.xlu0 %v640, 120
        %v649 = vpop.permute.xlu0 %648
        %650 = vrot.lane.b32.xlu0 %v643, 120
        %v651 = vpop.permute.xlu0 %650
        %652 = vrot.lane.b32.xlu0 %v645, 120
        %v653 = vpop.permute.xlu0 %652
        %654 = vrot.lane.b32.xlu0 %v647, 120
        %v655 = vpop.permute.xlu0 %654
        %v656 = vsel %vm399, %v649, %v651
        %v657 = vsel %vm399, %v653, %v655
        %v660 = vadd.f32 %v605, %v656
        %v661 = vadd.f32 %v606, %v657
        %s662 = scalar_lea.vmem %s249, 128 [#allocation6]
        %v663 = vld [vmem:[%s662] sm:$0xff]
        %v664 = vld [vmem:[%s662 + $0x8] sm:$0xff]
        %v667 = vrot.slane %v663, 6
        %v668 = vrot.slane %v664, 6
        %v669 = vsel %vm584, %v667, %v668
        %670 = vrot.lane.b32.xlu0 %v667, 16
        %v671 = vpop.permute.xlu0 %670
        %672 = vrot.lane.b32.xlu0 %v669, 16
        %v673 = vpop.permute.xlu0 %672
        %674 = vrot.lane.b32.xlu0 %v668, 16
        %v675 = vpop.permute.xlu0 %674
        %v679 = vmul.f32 %v577, %v671
        %v680 = vmul.f32 %v607, %v671
        %v681 = vmul.f32 %v363, %v673
        %v682 = vmul.f32 %v371, %v673
        %v683 = vmul.f32 %v578, %v675
        %v684 = vmul.f32 %v608, %v675
        %v691 = vrot.slane %v679, 2
        %v692 = vrot.slane %v681, 2
        %v693 = vsel %vm597, %v691, %v692
        %v694 = vrot.slane %v680, 2
        %v695 = vrot.slane %v682, 2
        %v696 = vsel %vm597, %v694, %v695
        %v697 = vrot.slane %v683, 2
        %v698 = vsel %vm597, %v692, %v697
        %v699 = vrot.slane %v684, 2
        %v700 = vsel %vm597, %v695, %v699
        %701 = vrot.lane.b32.xlu0 %v693, 112
        %v702 = vpop.permute.xlu0 %701
        %703 = vrot.lane.b32.xlu0 %v696, 112
        %v704 = vpop.permute.xlu0 %703
        %705 = vrot.lane.b32.xlu0 %v698, 112
        %v706 = vpop.permute.xlu0 %705
        %707 = vrot.lane.b32.xlu0 %v700, 112
        %v708 = vpop.permute.xlu0 %707
        %v709 = vsel %vm433, %v702, %v704
        %v710 = vsel %vm433, %v706, %v708
        %v713 = vadd.f32 %v660, %v709
        %v714 = vadd.f32 %v661, %v710
        %v715 = vld [vmem:[%s3] sm:$0x1]
        %v716 = vlaneseq
        %v717 = vshrl.u32 %v716, 7
        %v718 = vsub.s32 0, %v717
        %v719 = vrot.slane %v715, %v718
        %v720 = vadd.f32 %v713, %v719
        %v721 = vadd.f32 %v714, %v719
        %v722 = vmax.f32 %v720, 0.0
        %v723 = vmax.f32 %v721, 0.0
        %v724 = vmin.f32 %v722, 6.0
        %v725 = vmin.f32 %v723, 6.0
        %v726 = vld [vmem:[%s3 + $0x1] sm:$0x1]
        %v727 = vld [vmem:[%s258] sm:$0xff]
        %v728 = vld [vmem:[%s258 + $0x8] sm:$0xff]
        %v729 = vld [vmem:[%s258 + $0x10] sm:$0xff]
        %v730 = vld [vmem:[%s258 + $0x18] sm:$0xff]
        %v731 = vld [vmem:[%s258 + $0x20] sm:$0xff]
        %v732 = vld [vmem:[%s258 + $0x28] sm:$0xff]
        %v733 = vld [vmem:[%s258 + $0x30] sm:$0xff]
        %v734 = vld [vmem:[%s258 + $0x38] sm:$0xff]
        %v735 = vld [vmem:[%s258 + $0x40] sm:$0xff]
        %v736 = vld [vmem:[%s258 + $0x48] sm:$0xff]
        %v737 = vld [vmem:[%s258 + $0x50] sm:$0xff]
        %v738 = vld [vmem:[%s258 + $0x58] sm:$0xff]
        %v739 = vld [vmem:[%s258 + $0x60] sm:$0xff]
        %v740 = vld [vmem:[%s258 + $0x68] sm:$0xff]
        %v741 = vld [vmem:[%s258 + $0x70] sm:$0xff]
        %v742 = vld [vmem:[%s258 + $0x78] sm:$0xff]
        %v743 = vlaneseq
        %v744 = vshrl.u32 %v743, 7
        %v745 = vsub.s32 0, %v744
        %v746 = vrot.slane %v726, %v745
        %747 = vmatprep.subr.mxu0 0.0
        %748 = vmatpush1.msra.mxu0 %v727
        %749 = vmatprep.subr.mxu0 0.0
        %750 = vmatpush1.msra.mxu0 %v728
        %751 = vmatprep.subr.mxu0 0.0
        %752 = vmatpush1.msra.mxu0 %v729
        %753 = vmatprep.subr.mxu0 0.0
        %754 = vmatpush1.msra.mxu0 %v730
        %755 = vmatprep.subr.mxu0 0.0
        %756 = vmatpush1.msra.mxu0 %v731
        %757 = vmatprep.subr.mxu0 0.0
        %758 = vmatpush1.msra.mxu0 %v732
        %759 = vmatprep.subr.mxu0 0.0
        %760 = vmatpush1.msra.mxu0 %v733
        %761 = vmatprep.subr.mxu0 0.0
        %762 = vmatpush1.msra.mxu0 %v734
        %763 = vmatprep.subr.mxu0 0.0
        %764 = vmatpush1.msra.mxu0 %v735
        %765 = vmatprep.subr.mxu0 0.0
        %766 = vmatpush1.msra.mxu0 %v736
        %767 = vmatprep.subr.mxu0 0.0
        %768 = vmatpush1.msra.mxu0 %v737
        %769 = vmatprep.subr.mxu0 0.0
        %770 = vmatpush1.msra.mxu0 %v738
        %771 = vmatprep.subr.mxu0 0.0
        %772 = vmatpush1.msra.mxu0 %v739
        %773 = vmatprep.subr.mxu0 0.0
        %774 = vmatpush1.msra.mxu0 %v740
        %775 = vmatprep.subr.mxu0 0.0
        %776 = vmatpush1.msra.mxu0 %v741
        %777 = vmatprep.subr.mxu0 0.0
        %778 = vmatpush1.msra.mxu0 %v742
        %779 = vmatprep.subr.mxu0 0.0
        %780 = vmatpush1.msra.mxu0 0.0
        %781 = vmatprep.subr.mxu0 0.0
        %782 = vmatpush1.msra.mxu0 0.0
        %783 = vmatprep.subr.mxu0 0.0
        %784 = vmatpush1.msra.mxu0 0.0
        %785 = vmatprep.subr.mxu0 0.0
        %786 = vmatpush1.msra.mxu0 0.0
        %787 = vmatprep.subr.mxu0 0.0
        %788 = vmatpush1.msra.mxu0 0.0
        %789 = vmatprep.subr.mxu0 0.0
        %790 = vmatpush1.msra.mxu0 0.0
        %791 = vmatprep.subr.mxu0 0.0
        %792 = vmatpush1.msra.mxu0 0.0
        %793 = vmatprep.subr.mxu0 0.0
        %794 = vmatpush1.msra.mxu0 0.0
        %795 = vmatprep.subr.mxu0 0.0
        %796 = vmatpush1.msra.mxu0 0.0
        %797 = vmatprep.subr.mxu0 0.0
        %798 = vmatpush1.msra.mxu0 0.0
        %799 = vmatprep.subr.mxu0 0.0
        %800 = vmatpush1.msra.mxu0 0.0
        %801 = vmatprep.subr.mxu0 0.0
        %802 = vmatpush1.msra.mxu0 0.0
        %803 = vmatprep.subr.mxu0 0.0
        %804 = vmatpush1.msra.mxu0 0.0
        %805 = vmatprep.subr.mxu0 0.0
        %806 = vmatpush1.msra.mxu0 0.0
        %807 = vmatprep.subr.mxu0 0.0
        %808 = vmatpush1.msra.mxu0 0.0
        %809 = vmatprep.subr.mxu0 0.0
        %810 = vmatpush1.msra.mxu0 0.0
        %811 = vmatprep.mubr.f32.mxu0 0.0
        %812 = vmatmul.mubr.f32.gmra.mrb[0].mxu0 %v724
        %v813 = vpop.f32.mrb[0].mxu0
        %v814 = vadd.f32 %v746, %v813
        %v815 = vpop.f32.mrb[0].mxu0
        %816 = vdwg.mxu0
        %v817 = vadd.f32 %v814, %v293
        %818 = vst [vmem:[%s292] sm:$0xff] %v817
        %s819 = scalar_lea.vmem %s258, 128 [#allocation8]
        %v820 = vld [vmem:[%s819] sm:$0xff]
        %v821 = vld [vmem:[%s819 + $0x8] sm:$0xff]
        %v822 = vld [vmem:[%s819 + $0x10] sm:$0xff]
        %v823 = vld [vmem:[%s819 + $0x18] sm:$0xff]
        %v824 = vld [vmem:[%s819 + $0x20] sm:$0xff]
        %v825 = vld [vmem:[%s819 + $0x28] sm:$0xff]
        %v826 = vld [vmem:[%s819 + $0x30] sm:$0xff]
        %v827 = vld [vmem:[%s819 + $0x38] sm:$0xff]
        %v828 = vld [vmem:[%s819 + $0x40] sm:$0xff]
        %v829 = vld [vmem:[%s819 + $0x48] sm:$0xff]
        %v830 = vld [vmem:[%s819 + $0x50] sm:$0xff]
        %v831 = vld [vmem:[%s819 + $0x58] sm:$0xff]
        %v832 = vld [vmem:[%s819 + $0x60] sm:$0xff]
        %v833 = vld [vmem:[%s819 + $0x68] sm:$0xff]
        %v834 = vld [vmem:[%s819 + $0x70] sm:$0xff]
        %v835 = vld [vmem:[%s819 + $0x78] sm:$0xff]
        %836 = vmatprep.subr.mxu0 0.0
        %837 = vmatpush1.msra.mxu0 %v820
        %838 = vmatprep.subr.mxu0 0.0
        %839 = vmatpush1.msra.mxu0 %v821
        %840 = vmatprep.subr.mxu0 0.0
        %841 = vmatpush1.msra.mxu0 %v822
        %842 = vmatprep.subr.mxu0 0.0
        %843 = vmatpush1.msra.mxu0 %v823
        %844 = vmatprep.subr.mxu0 0.0
        %845 = vmatpush1.msra.mxu0 %v824
        %846 = vmatprep.subr.mxu0 0.0
        %847 = vmatpush1.msra.mxu0 %v825
        %848 = vmatprep.subr.mxu0 0.0
        %849 = vmatpush1.msra.mxu0 %v826
        %850 = vmatprep.subr.mxu0 0.0
        %851 = vmatpush1.msra.mxu0 %v827
        %852 = vmatprep.subr.mxu0 0.0
        %853 = vmatpush1.msra.mxu0 %v828
        %854 = vmatprep.subr.mxu0 0.0
        %855 = vmatpush1.msra.mxu0 %v829
        %856 = vmatprep.subr.mxu0 0.0
        %857 = vmatpush1.msra.mxu0 %v830
        %858 = vmatprep.subr.mxu0 0.0
        %859 = vmatpush1.msra.mxu0 %v831
        %860 = vmatprep.subr.mxu0 0.0
        %861 = vmatpush1.msra.mxu0 %v832
        %862 = vmatprep.subr.mxu0 0.0
        %863 = vmatpush1.msra.mxu0 %v833
        %864 = vmatprep.subr.mxu0 0.0
        %865 = vmatpush1.msra.mxu0 %v834
        %866 = vmatprep.subr.mxu0 0.0
        %867 = vmatpush1.msra.mxu0 %v835
        %868 = vmatprep.subr.mxu0 0.0
        %869 = vmatpush1.msra.mxu0 0.0
        %870 = vmatprep.subr.mxu0 0.0
        %871 = vmatpush1.msra.mxu0 0.0
        %872 = vmatprep.subr.mxu0 0.0
        %873 = vmatpush1.msra.mxu0 0.0
        %874 = vmatprep.subr.mxu0 0.0
        %875 = vmatpush1.msra.mxu0 0.0
        %876 = vmatprep.subr.mxu0 0.0
        %877 = vmatpush1.msra.mxu0 0.0
        %878 = vmatprep.subr.mxu0 0.0
        %879 = vmatpush1.msra.mxu0 0.0
        %880 = vmatprep.subr.mxu0 0.0
        %881 = vmatpush1.msra.mxu0 0.0
        %882 = vmatprep.subr.mxu0 0.0
        %883 = vmatpush1.msra.mxu0 0.0
        %884 = vmatprep.subr.mxu0 0.0
        %885 = vmatpush1.msra.mxu0 0.0
        %886 = vmatprep.subr.mxu0 0.0
        %887 = vmatpush1.msra.mxu0 0.0
        %888 = vmatprep.subr.mxu0 0.0
        %889 = vmatpush1.msra.mxu0 0.0
        %890 = vmatprep.subr.mxu0 0.0
        %891 = vmatpush1.msra.mxu0 0.0
        %892 = vmatprep.subr.mxu0 0.0
        %893 = vmatpush1.msra.mxu0 0.0
        %894 = vmatprep.subr.mxu0 0.0
        %895 = vmatpush1.msra.mxu0 0.0
        %896 = vmatprep.subr.mxu0 0.0
        %897 = vmatpush1.msra.mxu0 0.0
        %898 = vmatprep.subr.mxu0 0.0
        %899 = vmatpush1.msra.mxu0 0.0
        %900 = vmatprep.mubr.f32.mxu0 0.0
        %901 = vmatmul.mubr.f32.gmra.mrb[0].mxu0 %v725
        %v902 = vpop.f32.mrb[0].mxu0
        %v903 = vadd.f32 %v746, %v902
        %v904 = vpop.f32.mrb[0].mxu0
        %905 = vdwg.mxu0
        %v906 = vadd.f32 %v903, %v294
        %907 = vst [vmem:[%s292 + $0x8] sm:$0xff] %v906
        %s908 = sand.u32 %s131, 1
        %s909 = scalar_lea.sflag [#allocation5], %s908
        %s910 = sand.u32 %s131, 1
        %s911 = smul.addr %s910, 16
        %s912 = scalar_lea.vmem [#allocation9], %s911
        // Predicated region
        $region49: #{tpu_custom_call.1} parent=35 // pred_check
          %p913 = pneg %p141
        $region50: #{tpu_custom_call.1} parent=35 // pred_check_branch
          %915 = sbr.rel (%p913) target = $region52
        $region51: #{tpu_custom_call.1} parent=35 // pred_region
          %s917 = ssub.s32 256, 256
          %918 = vsyncadd %s909, %s917
          %s919 = smul.addr %s24, 2
          %s920 = smul.addr %s919, 128
          %s921 = scalar_lea.hbm %s4, %s920
          %s922 = sshll.u32 %s912, 4
          %s923 = int_to_ptr.vmem [resolvable:$true] %s922
          %928 = dma.vmem_to_hbm [thread:$0]  %s923, 256, %s921, %s909, 128, 128, 8
        $region52: #{tpu_custom_call.1} parent=35 // pred_fallthru
          _
      $region36: #{tpu_custom_call.1} parent=5 // pred_fallthru
        _
      %p929 = scmp.le.s32.totalorder 2, %s19
      // Predicated region
      $region53: #{tpu_custom_call.1} parent=5 // pred_check
        %p930 = pneg %p929
      $region54: #{tpu_custom_call.1} parent=5 // pred_check_branch
        %932 = sbr.rel (%p930) target = $region56
      $region55: #{tpu_custom_call.1} parent=5 // pred_region
        %s933 = ssub.s32 %s19, 2
        // Predicated region
        $region57: #{tpu_custom_call.1} parent=55 // pred_check
          %p934 = pneg %p147
        $region58: #{tpu_custom_call.1} parent=55 // pred_check_branch
          %936 = sbr.rel (%p934) target = $region60
        $region59: #{tpu_custom_call.1} parent=55 // pred_region
          %s937 = sand.u32 %s132, 1
          %s938 = scalar_lea.sflag [#allocation5], %s937
          %s939 = sand.u32 %s132, 1
          %s940 = smul.addr %s939, 16
          %s941 = scalar_lea.vmem [#allocation9], %s940
          %942 = dma.done %s938, 256
        $region60: #{tpu_custom_call.1} parent=55 // pred_fallthru
          _
      $region56: #{tpu_custom_call.1} parent=5 // pred_fallthru
        _
    $region6: #{tpu_custom_call.1} parent=1 // loop_footer
      %s23 = sadd.s32 1, %s19
    $region7: #{tpu_custom_call.1} parent=1 // loop_footer_branch
      %18 = sbr.rel target = $region3
    $region8: #{tpu_custom_call.1} parent=1 // loop_exit
      _
    %943 = vsyncpa [#allocation4], 1
    %s944 = scalar_lea.sflag [#allocation4], 1
    %945 = vsyncpa %s944, 1
    %946 = vsyncpa [#allocation7], 1
    %s947 = scalar_lea.sflag [#allocation7], 1
    %948 = vsyncpa %s947, 1
    %949 = vsyncpa [#allocation5], 1
    %s950 = scalar_lea.sflag [#allocation5], 1
    %951 = vsyncpa %s950, 1

</llo_original>
